<compile_context>
chip_gen: v6e
topology: v6e:2x2x1
jax: 0.10.0
libtpu: 0.0.40
codegen_flags: <defaults>
</compile_context>

<pallas_src>
import functools

import jax
import jax.numpy as jnp
from jax.experimental import pallas as pl
from jax.experimental.pallas import tpu as pltpu


def _round_up(x, m):
    return ((x + m - 1) // m) * m


# EW stays VMEM-resident inside the kernel when its bf16 footprint is below
# this budget (double-buffered worst case still fits v7x's 64 MiB/TC VMEM
# together with the A / output blocks).
_EW_RESIDENT_BYTES = 8 * 1024 * 1024


def _choose_tiles(n):
    """Static (8,128)-legal tile sizes for the A @ EW kernel."""
    # Row tile: multiple of 16 (bf16 packs two rows per sublane), large to
    # amortize grid-step overhead and EW traffic.
    tm = min(1024, _round_up(n, 16))
    # Keep at least two row tiles when possible so the "parallel" row axis can
    # shard across both TensorCores on v7x.
    if _round_up(n, tm) // tm < 2 and n > 16:
        tm = _round_up((n + 1) // 2, 16)
    # K tile: multiple of 128 (lane-dense A minor dim), large to cut restreams.
    tk = min(2048, _round_up(n, 128))
    return tm, tk


# ----------------------------------------------------------------------------
# Pallas kernel: out[i-tile, :] = b + sum_k A[i-tile, k-tile] @ EW[k-tile, :]
# The f32 output block is VMEM-resident across the K axis (index map (i, 0)),
# so it doubles as the accumulator: bias-init at k == 0, accumulate after.
# ----------------------------------------------------------------------------
def _adj_propagate_kernel(a_ref, ew_ref, b_ref, out_ref, *, ew_resident):
    k = pl.program_id(1)

    @pl.when(k == 0)
    def _():
        out_ref[...] = jnp.zeros_like(out_ref) + b_ref[...]   # bias init (f32)

    if ew_resident:
        ew = ew_ref[k]          # (tk, dp) slab of the VMEM-resident EW
    else:
        ew = ew_ref[...]        # (tk, dp) streamed slab
    out_ref[...] += jnp.dot(a_ref[...], ew,
                            preferred_element_type=jnp.float32)


def adj_propagate(a_bf16, ew_in, bias_f32, *, tm, tk, ew_resident):
    """Tiled A @ EW + b.

    a_bf16 : (mp, kp) bf16   padded adjacency
    ew_in  : (kp//tk, tk, dp) bf16 when ew_resident else (kp, dp) bf16
    bias   : (1, dp) f32
    """
    mp, kp = a_bf16.shape
    dp = ew_in.shape[-1]
    grid = (mp // tm, kp // tk)

    if ew_resident:
        assert ew_in.shape == (kp // tk, tk, dp)
        # Constant index map => the whole EW is DMA'd once and stays resident.
        ew_spec = pl.BlockSpec((kp // tk, tk, dp), lambda i, k: (0, 0, 0))
    else:
        assert ew_in.shape == (kp, dp)
        ew_spec = pl.BlockSpec((tk, dp), lambda i, k: (k, 0))

    ew_reads = 1 if ew_resident else grid[0]
    cost = pl.CostEstimate(
        flops=2 * mp * kp * dp,
        transcendentals=0,
        bytes_accessed=mp * kp * 2 + ew_reads * kp * dp * 2 + mp * dp * 4)

    kernel = functools.partial(_adj_propagate_kernel, ew_resident=ew_resident)
    return pl.pallas_call(
        kernel,
        out_shape=jax.ShapeDtypeStruct((mp, dp), jnp.float32),
        grid_spec=pltpu.PrefetchScalarGridSpec(
            num_scalar_prefetch=0,
            grid=grid,
            in_specs=[
                pl.BlockSpec((tm, tk), lambda i, k: (i, k)),   # A row/col tile
                ew_spec,                                       # EW
                pl.BlockSpec((1, dp), lambda i, k: (0, 0)),    # bias
            ],
            out_specs=pl.BlockSpec((tm, dp), lambda i, k: (i, 0)),
        ),
        compiler_params=pltpu.CompilerParams(
            dimension_semantics=("parallel", "arbitrary"),
            vmem_limit_bytes=48 * 1024 * 1024),
        cost_estimate=cost,
    )(a_bf16, ew_in, bias_f32)


# ----------------------------------------------------------------------------
# One-time adjacency preparation (hoisted OUT of the jitted forward):
# cast to bf16 first, then zero-pad to tile multiples.
# ----------------------------------------------------------------------------
def prepare_adjacency(a_hat, *, tm, tk):
    n = a_hat.shape[0]
    mp = _round_up(n, tm)
    kp = _round_up(n, tk)
    a_bf16 = a_hat.astype(jnp.bfloat16)
    return jnp.pad(a_bf16, ((0, mp - n), (0, kp - n)))


# ----------------------------------------------------------------------------
# LRGCCF forward (drop_flag=False path).
# ----------------------------------------------------------------------------
@functools.partial(jax.jit, static_argnames=("n_user",))
def lrgccf_forward(a_bf16_pad, user_emb, item_emb, gc_weights, gc_biases,
                   users, pos_items, neg_items, *, n_user):
    n = user_emb.shape[0] + item_emb.shape[0]
    tm, tk = _choose_tiles(n)
    mp = _round_up(n, tm)
    kp = _round_up(n, tk)
    assert a_bf16_pad.shape == (mp, kp), (a_bf16_pad.shape, (mp, kp))

    ego = jnp.concatenate([user_emb, item_emb], axis=0)      # (n, emb) f32
    all_embeddings = [ego]
    for w, b in zip(gc_weights, gc_biases):
        d_out = w.shape[1]
        dp = _round_up(d_out, 128)                           # lane-dense out
        # Reassociate (A @ E) @ W -> A @ (E @ W); E @ W is tiny, plain JAX.
        ew = jnp.dot(ego, w, preferred_element_type=jnp.float32)
        # Cast before padding: no f32 padded intermediates.
        ew_bf16 = jnp.pad(ew.astype(jnp.bfloat16),
                          ((0, kp - n), (0, dp - d_out)))
        b_pad = jnp.pad(b, ((0, 0), (0, dp - d_out)))

        ew_resident = (kp * dp * 2) <= _EW_RESIDENT_BYTES
        ew_in = ew_bf16.reshape(kp // tk, tk, dp) if ew_resident else ew_bf16

        out_pad = adj_propagate(a_bf16_pad, ew_in, b_pad,
                                tm=tm, tk=tk, ew_resident=ew_resident)
        ego = out_pad[:n, :d_out]
        all_embeddings.append(ego)

    all_embeddings = jnp.concatenate(all_embeddings, axis=1)
    u_g_embeddings = all_embeddings[:n_user, :]
    i_g_embeddings = all_embeddings[n_user:, :]

    u_g_embeddings = jnp.take(u_g_embeddings, users, axis=0)
    pos_i_g_embeddings = jnp.take(i_g_embeddings, pos_items, axis=0)
    neg_i_g_embeddings = jnp.take(i_g_embeddings, neg_items, axis=0)
    return u_g_embeddings, pos_i_g_embeddings, neg_i_g_embeddings


# ----------------------------------------------------------------------------
# Pure-JAX f32 reference (original (A @ E) @ W + b formulation).
# ----------------------------------------------------------------------------
def lrgccf_reference(a_hat, user_emb, item_emb, gc_weights, gc_biases,
                     users, pos_items, neg_items, n_user):
    ego = jnp.concatenate([user_emb, item_emb], axis=0)
    all_emb = [ego]
    for w, b in zip(gc_weights, gc_biases):
        side = jnp.dot(a_hat, ego, preferred_element_type=jnp.float32)
        ego = jnp.dot(side, w, preferred_element_type=jnp.float32) + b
        all_emb.append(ego)
    all_emb = jnp.concatenate(all_emb, axis=1)
    u = jnp.take(all_emb[:n_user], users, axis=0)
    p = jnp.take(all_emb[n_user:], pos_items, axis=0)
    ng = jnp.take(all_emb[n_user:], neg_items, axis=0)
    return u, p, ng


# ----------------------------------------------------------------------------
# Deterministic parameter / input construction (synthetic, no checkpoints).
# ----------------------------------------------------------------------------
def xavier_uniform(key, shape):
    fan_in, fan_out = shape[0], shape[1]
    bound = (6.0 / (fan_in + fan_out)) ** 0.5
    return jax.random.uniform(key, shape, jnp.float32, -bound, bound)


def build_norm_adj(key, n_user, n_item):
    # Random bipartite interaction matrix R, then symmetric normalization
    # D^{-1/2} A D^{-1/2} of the full (user+item) adjacency.
    r = (jax.random.uniform(key, (n_user, n_item)) < 0.2).astype(jnp.float32)
    n = n_user + n_item
    a = jnp.zeros((n, n), jnp.float32)
    a = a.at[:n_user, n_user:].set(r)
    a = a.at[n_user:, :n_user].set(r.T)
    deg = jnp.sum(a, axis=1)
    d_inv_sqrt = jnp.where(deg > 0, 1.0 / jnp.sqrt(jnp.maximum(deg, 1e-12)), 0.0)
    return a * d_inv_sqrt[:, None] * d_inv_sqrt[None, :]


if __name__ == "__main__":
    n_user, n_item = 24, 40          # N = 64 nodes total
    emb_size = 32
    layer_sizes = [32, 32]           # args.layer_size = '[32, 32]'
    batch = 8

    key = jax.random.PRNGKey(0)
    k_adj, k_u, k_i, k_w, k_idx = jax.random.split(key, 5)

    a_hat = build_norm_adj(k_adj, n_user, n_item)
    user_emb = xavier_uniform(k_u, (n_user, emb_size))
    item_emb = xavier_uniform(k_i, (n_item, emb_size))

    dims = [emb_size] + layer_sizes
    gc_weights, gc_biases = [], []
    wkeys = jax.random.split(k_w, 2 * len(layer_sizes))
    for k in range(len(layer_sizes)):
        gc_weights.append(xavier_uniform(wkeys[2 * k], (dims[k], dims[k + 1])))
        gc_biases.append(xavier_uniform(wkeys[2 * k + 1], (1, dims[k + 1])))

    ku, kpos, kneg = jax.random.split(k_idx, 3)
    users = jax.random.randint(ku, (batch,), 0, n_user)
    pos_items = jax.random.randint(kpos, (batch,), 0, n_item)
    neg_items = jax.random.randint(kneg, (batch,), 0, n_item)

    # One-time adjacency prep (constant per model) outside the jitted forward.
    n_total = n_user + n_item
    tm, tk = _choose_tiles(n_total)
    a_bf16_pad = prepare_adjacency(a_hat, tm=tm, tk=tk)
    jax.block_until_ready(a_bf16_pad)

    u_g, pos_g, neg_g = lrgccf_forward(
        a_bf16_pad, user_emb, item_emb, tuple(gc_weights), tuple(gc_biases),
        users, pos_items, neg_items, n_user=n_user)
    jax.block_until_ready((u_g, pos_g, neg_g))

    expected_dim = emb_size + sum(layer_sizes)
    assert u_g.shape == (batch, expected_dim)
    assert pos_g.shape == (batch, expected_dim)
    assert neg_g.shape == (batch, expected_dim)

    # Loose tolerance: the kernel streams A / EW in bf16 (f32 accumulation).
    ref_u, ref_p, ref_n = lrgccf_reference(
        a_hat, user_emb, item_emb, gc_weights, gc_biases,
        users, pos_items, neg_items, n_user)
    for got, want in ((u_g, ref_u), (pos_g, ref_p), (neg_g, ref_n)):
        assert jnp.allclose(got, want, atol=5e-2, rtol=5e-2), (
            float(jnp.max(jnp.abs(got - want))))

    print("KERNEL_OK")
</pallas_src>

<mosaic_0001>
module attributes {stable_mosaic.version = 11 : i64} {
  func.func @_adj_propagate_kernel(%arg0: i32, %arg1: i32, %arg2: memref<32x128xbf16, #tpu.memory_space<vmem>>, %arg3: memref<1x128x128xbf16, #tpu.memory_space<vmem>>, %arg4: memref<1x128xf32, #tpu.memory_space<vmem>>, %arg5: memref<32x128xf32, #tpu.memory_space<vmem>>) attributes {dimension_semantics = [#tpu.dimension_semantics<parallel>, #tpu.dimension_semantics<arbitrary>], iteration_bounds = array<i64: 2, 1>, scalar_prefetch = 0 : i64, scratch_operands = 0 : i64, tpu.core_type = #tpu.core_type<tc>, window_params = [{transform_indices = @transform_0, window_bounds = array<i64: 32, 128>}, {pipeline_mode = #tpu.pipeline_mode<synchronous>, transform_indices = @transform_1, window_bounds = array<i64: 1, 128, 128>}, {pipeline_mode = #tpu.pipeline_mode<synchronous>, transform_indices = @transform_2, window_bounds = array<i64: 1, 128>}, {transform_indices = @transform_3, window_bounds = array<i64: 32, 128>}]} {
    %c0_i32 = arith.constant 0 : i32
    %0 = arith.cmpi eq, %arg1, %c0_i32 : i32
    %1 = arith.extui %0 : i1 to i32
    %c0_i32_0 = arith.constant 0 : i32
    %2 = arith.cmpi ne, %1, %c0_i32_0 : i32
    scf.if %2 {
      %cst_8 = arith.constant 0.000000e+00 : f32
      %11 = vector.broadcast %cst_8 : f32 to vector<32x128xf32>
      %c0_9 = arith.constant 0 : index
      %c0_10 = arith.constant 0 : index
      %12 = vector.load %arg4[%c0_9, %c0_10] : memref<1x128xf32, #tpu.memory_space<vmem>>, vector<1x128xf32>
      %13 = vector.broadcast %12 : vector<1x128xf32> to vector<32x128xf32>
      %14 = arith.addf %11, %13 : vector<32x128xf32>
      %c0_11 = arith.constant 0 : index
      %c0_12 = arith.constant 0 : index
      %15 = vector.load %arg5[%c0_11, %c0_12] : memref<32x128xf32, #tpu.memory_space<vmem>>, vector<32x128xf32>
      tpu.vector_store %arg5[%c0_11, %c0_12], %14 {strides = array<i32>} : memref<32x128xf32, #tpu.memory_space<vmem>>, vector<32x128xf32>,
    } else {
    }
    %3 = arith.index_cast %arg1 : i32 to index
    %c0 = arith.constant 0 : index
    %c0_1 = arith.constant 0 : index
    %4 = vector.load %arg3[%3, %c0, %c0_1] : memref<1x128x128xbf16, #tpu.memory_space<vmem>>, vector<1x128x128xbf16>
    %5 = vector.shape_cast %4 : vector<1x128x128xbf16> to vector<128x128xbf16>
    %c0_2 = arith.constant 0 : index
    %c0_3 = arith.constant 0 : index
    %6 = vector.load %arg5[%c0_2, %c0_3] : memref<32x128xf32, #tpu.memory_space<vmem>>, vector<32x128xf32>
    %c0_4 = arith.constant 0 : index
    %c0_5 = arith.constant 0 : index
    %7 = vector.load %arg2[%c0_4, %c0_5] : memref<32x128xbf16, #tpu.memory_space<vmem>>, vector<32x128xbf16>
    %cst = arith.constant dense<0.000000e+00> : vector<32x128xf32>
    %8 = tpu.matmul %7, %5, %cst {dimension_numbers = #tpu.dot_dimension_numbers<[1], [0], [0], [1], [0, 0, 1, 1], [], []>} : vector<32x128xbf16>, vector<128x128xbf16>, vector<32x128xf32> -> vector<32x128xf32>
    %9 = arith.addf %6, %8 : vector<32x128xf32>
    %c0_6 = arith.constant 0 : index
    %c0_7 = arith.constant 0 : index
    %10 = vector.load %arg5[%c0_6, %c0_7] : memref<32x128xf32, #tpu.memory_space<vmem>>, vector<32x128xf32>
    tpu.vector_store %arg5[%c0_6, %c0_7], %9 {strides = array<i32>} : memref<32x128xf32, #tpu.memory_space<vmem>>, vector<32x128xf32>,
    return
  }
  func.func @transform_0(%arg0: i32, %arg1: i32) -> (i32, i32) {
    %c0_i32 = arith.constant 0 : i32
    return %arg0, %arg1 : i32, i32
  }
  func.func @transform_1(%arg0: i32, %arg1: i32) -> (i32, i32, i32) {
    %c0_i32 = arith.constant 0 : i32
    %c0_i32_0 = arith.constant 0 : i32
    %c0_i32_1 = arith.constant 0 : i32
    %c0_i32_2 = arith.constant 0 : i32
    return %c0_i32, %c0_i32_0, %c0_i32_1 : i32, i32, i32
  }
  func.func @transform_2(%arg0: i32, %arg1: i32) -> (i32, i32) {
    %c0_i32 = arith.constant 0 : i32
    %c0_i32_0 = arith.constant 0 : i32
    %c0_i32_1 = arith.constant 0 : i32
    return %c0_i32, %c0_i32_0 : i32, i32
  }
  func.func @transform_3(%arg0: i32, %arg1: i32) -> (i32, i32) {
    %c0_i32 = arith.constant 0 : i32
    %c0_i32_0 = arith.constant 0 : i32
    return %arg0, %c0_i32 : i32, i32
  }
}

</mosaic_0001>

<llo_original>
// kernel: lrgccf_forward.2
$region0: #{lrgccf_forward.2}
  #allocation0 [shape = 'u32[]', space=smem, size = 0x4, offset = 0x4, fixed_abs, tag = 'smem constant byte address 0x4 - core index']
  #allocation1 [shape = 'u32[144,128]{1,0:T(1,128)}', space=vmem, size = 0x12000, scoped, tag = 'internal scratch']
  %s0 = inlined_call_operand.vmem [shape: bf16[64,128], index: 0, kind: input, shape index: {}]
  %s1 = inlined_call_operand.vmem [shape: bf16[1,128,128], index: 1, kind: input, shape index: {}]
  %s2 = inlined_call_operand.vmem [shape: f32[1,128], index: 2, kind: input, shape index: {}]
  %s3 = inlined_call_operand.vmem [shape: f32[64,128], index: 3, kind: output, shape index: {}]
  %s4 = sld [smem:[#allocation0]]
  $region49: #{lrgccf_forward.2} parent=0
    _
  %s6 = ssub.s32 1, %s4
  %s7 = scalar_select 0, %s6, %s4
  loop: start=0, step=1, limit=4
  $region2: #{lrgccf_forward.2} parent=0 // loop_pre_header
    _
  $region3: #{lrgccf_forward.2} parent=0 // loop_header
    %s9 = sphi 0, %s13
    %p10 = scmp.ge.s32.totalorder %s9, 4
    %s16 = sphi 0, %s28
    %s17 = sphi 0, %s24
    %s18 = sphi 0, %s16
    %s19 = sphi 0, %s17
    %s20 = sphi 0, %s18
    %s21 = sphi 0, %s19
    %s33 = sphi 0, %s35
    %s36 = sphi 0, %s33
    %s37 = sphi 0, %s36
    %s53 = sphi 0, %s37
    %s57 = sphi 0, %s57
    %s59 = sphi 0, %s57
    %s60 = sphi 0, %s59
    %s74 = sphi 0, %s60
    %s78 = sphi 0, %s78
    %s80 = sphi 0, %s78
    %s81 = sphi 0, %s80
    %s95 = sphi 0, %s81
    %s101 = sphi 0, %s103
    %s104 = sphi 0, %s101
    %s105 = sphi 0, %s104
    %s121 = sphi 0, %s105
  $region4: #{lrgccf_forward.2} parent=0 // loop_header_branch
    %12 = sbr.rel (%p10) target = $region8
  $region5: #{lrgccf_forward.2} parent=0 // loop_body
    %s14 = ssub.s32 %s9, 1
    %s15 = ssub.s32 %s9, 2
    %s22 = sadd.s32 1, %s17
    %p23 = scmp.ge.s32.totalorder %s22, 1
    %s24 = scalar_select %p23, 0, %s22
    %s25 = sadd.s32 1, %s16
    %s26 = scalar_select %p23, %s25, %s16
    %p27 = scmp.ge.s32.totalorder %s26, 2
    %s28 = scalar_select %p27, 0, %s26
    %s29 = ssub.s32 %s16, %s28
    %s30 = ssub.s32 %s17, %s24
    %s31 = sor.u32 %s29, %s30
    %p32 = scmp.eq.s32.totalorder %s31, 0
    %s34 = sadd.s32 %s33, 1
    %s35 = scalar_select %p32, %s33, %s34
    %p38 = pneg %p32
    %p39 = scmp.eq.s32.totalorder %s9, 1
    %p40 = por %p38, %p39
    %p41 = scmp.ne.s32.totalorder %s33, %s36
    %p42 = scmp.eq.s32.totalorder %s9, 0
    %p43 = por %p41, %p42
    %p44 = scmp.ne.s32.totalorder %s33, %s36
    %p45 = scmp.eq.s32.totalorder %s14, 1
    %p46 = por %p44, %p45
    %p47 = scmp.ne.s32.totalorder %s36, %s37
    %p48 = scmp.eq.s32.totalorder %s14, 0
    %p49 = por %p47, %p48
    %p50 = scmp.ne.s32.totalorder %s36, %s37
    %p51 = scmp.eq.s32.totalorder %s15, 1
    %p52 = por %p50, %p51
    %p54 = scmp.ne.s32.totalorder %s37, %s53
    %p55 = scmp.eq.s32.totalorder %s15, 0
    %p56 = por %p54, %p55
    %s58 = sadd.s32 %s57, 1
    %p61 = scmp.eq.s32.totalorder %s9, 1
    %p62 = scmp.ne.s32.totalorder %s57, %s59
    %p63 = scmp.eq.s32.totalorder %s9, 0
    %p64 = por %p62, %p63
    %p65 = scmp.ne.s32.totalorder %s57, %s59
    %p66 = scmp.eq.s32.totalorder %s14, 1
    %p67 = por %p65, %p66
    %p68 = scmp.ne.s32.totalorder %s59, %s60
    %p69 = scmp.eq.s32.totalorder %s14, 0
    %p70 = por %p68, %p69
    %p71 = scmp.ne.s32.totalorder %s59, %s60
    %p72 = scmp.eq.s32.totalorder %s15, 1
    %p73 = por %p71, %p72
    %p75 = scmp.ne.s32.totalorder %s60, %s74
    %p76 = scmp.eq.s32.totalorder %s15, 0
    %p77 = por %p75, %p76
    %s79 = sadd.s32 %s78, 1
    %p82 = scmp.eq.s32.totalorder %s9, 1
    %p83 = scmp.ne.s32.totalorder %s78, %s80
    %p84 = scmp.eq.s32.totalorder %s9, 0
    %p85 = por %p83, %p84
    %p86 = scmp.ne.s32.totalorder %s78, %s80
    %p87 = scmp.eq.s32.totalorder %s14, 1
    %p88 = por %p86, %p87
    %p89 = scmp.ne.s32.totalorder %s80, %s81
    %p90 = scmp.eq.s32.totalorder %s14, 0
    %p91 = por %p89, %p90
    %p92 = scmp.ne.s32.totalorder %s80, %s81
    %p93 = scmp.eq.s32.totalorder %s15, 1
    %p94 = por %p92, %p93
    %p96 = scmp.ne.s32.totalorder %s81, %s95
    %p97 = scmp.eq.s32.totalorder %s15, 0
    %p98 = por %p96, %p97
    %s99 = ssub.s32 %s16, %s28
    %p100 = scmp.eq.s32.totalorder %s99, 0
    %s102 = sadd.s32 %s101, 1
    %s103 = scalar_select %p100, %s101, %s102
    %p106 = pneg %p100
    %p107 = scmp.eq.s32.totalorder %s9, 1
    %p108 = por %p106, %p107
    %p109 = scmp.ne.s32.totalorder %s101, %s104
    %p110 = scmp.eq.s32.totalorder %s9, 0
    %p111 = por %p109, %p110
    %p112 = scmp.ne.s32.totalorder %s101, %s104
    %p113 = scmp.eq.s32.totalorder %s14, 1
    %p114 = por %p112, %p113
    %p115 = scmp.ne.s32.totalorder %s104, %s105
    %p116 = scmp.eq.s32.totalorder %s14, 0
    %p117 = por %p115, %p116
    %p118 = scmp.ne.s32.totalorder %s104, %s105
    %p119 = scmp.eq.s32.totalorder %s15, 1
    %p120 = por %p118, %p119
    %p122 = scmp.ne.s32.totalorder %s105, %s121
    %p123 = scmp.eq.s32.totalorder %s15, 0
    %p124 = por %p122, %p123
    %p125 = scmp.le.s32.totalorder 1, %s9
    %p126 = scmp.lt.s32.totalorder %s9, 3
    %p127 = pnand %p125, %p126
    %p128 = pneg %p127
    // Predicated region
    $region9: #{lrgccf_forward.2} parent=5 // pred_check
      _
    $region10: #{lrgccf_forward.2} parent=5 // pred_check_branch
      %130 = sbr.rel (%p127) target = $region12
    $region11: #{lrgccf_forward.2} parent=5 // pred_region
      %s131 = ssub.s32 %s9, 1
      // Predicated region
      $region13: #{lrgccf_forward.2} parent=11 // pred_check
        %p132 = pneg %p70
      $region14: #{lrgccf_forward.2} parent=11 // pred_check_branch
        %134 = sbr.rel (%p132) target = $region16
      $region15: #{lrgccf_forward.2} parent=11 // pred_region
        _
      $region16: #{lrgccf_forward.2} parent=11 // pred_fallthru
        _
      // Predicated region
      $region17: #{lrgccf_forward.2} parent=11 // pred_check
        %p135 = pneg %p91
      $region18: #{lrgccf_forward.2} parent=11 // pred_check_branch
        %137 = sbr.rel (%p135) target = $region20
      $region19: #{lrgccf_forward.2} parent=11 // pred_region
        _
      $region20: #{lrgccf_forward.2} parent=11 // pred_fallthru
        _
    $region12: #{lrgccf_forward.2} parent=5 // pred_fallthru
      _
    %p138 = scmp.lt.s32.totalorder %s9, 2
    // Predicated region
    $region21: #{lrgccf_forward.2} parent=5 // pred_check
      %p139 = pneg %p138
    $region22: #{lrgccf_forward.2} parent=5 // pred_check_branch
      %141 = sbr.rel (%p139) target = $region24
    $region23: #{lrgccf_forward.2} parent=5 // pred_region
      // Predicated region
      $region25: #{lrgccf_forward.2} parent=23 // pred_check
        %p142 = pneg %p43
      $region26: #{lrgccf_forward.2} parent=23 // pred_check_branch
        %144 = sbr.rel (%p142) target = $region28
      $region27: #{lrgccf_forward.2} parent=23 // pred_region
        %s145 = smul.u32 4, %s16
        %p146 = scmp.lt.s32.totalorder %s145, 7
        %s147 = scalar_select %p146, %s145, 7
        %p148 = scmp.lt.s32.totalorder %s17, 0
        %s149 = scalar_select %p148, %s17, 0
        %s150 = sadd.s32 %s149, %s147
        %s151 = smul.addr %s150, 4
        %s152 = scalar_lea.vmem %s0, %s151
        %s153 = smul.u32 4, %s16
      $region28: #{lrgccf_forward.2} parent=23 // pred_fallthru
        _
    $region24: #{lrgccf_forward.2} parent=5 // pred_fallthru
      _
    %p154 = scmp.le.s32.totalorder 1, %s9
    %p155 = scmp.lt.s32.totalorder %s9, 3
    %p156 = pnand %p154, %p155
    %p157 = pneg %p156
    // Predicated region
    $region29: #{lrgccf_forward.2} parent=5 // pred_check
      _
    $region30: #{lrgccf_forward.2} parent=5 // pred_check_branch
      %159 = sbr.rel (%p156) target = $region32
    $region31: #{lrgccf_forward.2} parent=5 // pred_region
      %s160 = ssub.s32 %s9, 1
      %s161 = smul.u32 4, %s18
      %p162 = scmp.lt.s32.totalorder %s161, 7
      %s163 = scalar_select %p162, %s161, 7
      %p164 = scmp.lt.s32.totalorder %s19, 0
      %s165 = scalar_select %p164, %s19, 0
      %s166 = sadd.s32 %s165, %s163
      %s167 = smul.addr %s166, 4
      %s168 = scalar_lea.vmem %s0, %s167
      %p169 = pneg %p49
      %p170 = pneg %p46
      %p171 = pneg %p70
      %p172 = pneg %p67
      %p173 = pneg %p91
      %p174 = pneg %p88
      %p175 = pneg %p117
      %p176 = pneg %p114
      %s177 = smul.u32 4, %s18
      %p178 = scmp.lt.s32.totalorder %s177, 7
      %s179 = scalar_select %p178, %s177, 7
      %s180 = smul.addr %s179, 8
      %s181 = scalar_lea.vmem %s3, %s180
      %s182 = smul.u32 4, %s18
      %p183 = scmp.lt.s32.totalorder %s182, 7
      %s184 = scalar_select %p183, %s182, 7
      %p185 = scmp.lt.s32.totalorder %s19, 0
      %s186 = scalar_select %p185, %s19, 0
      %s187 = sadd.s32 %s186, %s184
      %s188 = smul.addr %s187, 4
      %s189 = scalar_lea.vmem %s0, %s188
      %s190 = smul.u32 4, %s18
      %s191 = smul.u32 4, %s18
      %p192 = scmp.lt.s32.totalorder %s191, 7
      %s193 = scalar_select %p192, %s191, 7
      %s194 = smul.addr %s193, 8
      %s195 = scalar_lea.vmem %s3, %s194
      %s196 = smul.u32 4, %s18
      %p198 = scmp.eq.s32.totalorder %s19, 0
      // Predicated region
      $region33: #{lrgccf_forward.2} parent=31 // pred_check
        %p199 = pneg %p198
      $region34: #{lrgccf_forward.2} parent=31 // pred_check_branch
        %201 = sbr.rel (%p199) target = $region36
      $region35: #{lrgccf_forward.2} parent=31 // pred_region
        %v202 = vld [vmem:[%s2] sm:$0x1]
        %v204 = vlaneseq
        %v205 = vshrl.u32 %v204, 7
        %v206 = vsub.s32 0, %v205
        %v207 = vrot.slane %v202, %v206
        %v209 = vadd.f32 %v207, 0.0
        %210 = vst [vmem:[%s195] sm:$0xff] %v209
        %211 = vst [vmem:[%s195 + $0x8] sm:$0xff] %v209
        %212 = vst [vmem:[%s195 + $0x10] sm:$0xff] %v209
        %213 = vst [vmem:[%s195 + $0x18] sm:$0xff] %v209
      $region36: #{lrgccf_forward.2} parent=31 // pred_fallthru
        _
      %s214 = smul.u32 %s19, 16
      %s215 = smul.addr %s214, 4
      %s216 = scalar_lea.vmem %s1, %s215
      %v217 = vld [vmem:[%s216] sm:$0xf]
      %v218 = vld [vmem:[%s216 + $0x4] sm:$0xf]
      %v219 = vld [vmem:[%s216 + $0x8] sm:$0xf]
      %v220 = vld [vmem:[%s216 + $0xc] sm:$0xf]
      %v221 = vld [vmem:[%s216 + $0x10] sm:$0xf]
      %v222 = vld [vmem:[%s216 + $0x14] sm:$0xf]
      %v223 = vld [vmem:[%s216 + $0x18] sm:$0xf]
      %v224 = vld [vmem:[%s216 + $0x1c] sm:$0xf]
      %v225 = vld [vmem:[%s216 + $0x20] sm:$0xf]
      %v226 = vld [vmem:[%s216 + $0x24] sm:$0xf]
      %v227 = vld [vmem:[%s216 + $0x28] sm:$0xf]
      %v228 = vld [vmem:[%s216 + $0x2c] sm:$0xf]
      %v229 = vld [vmem:[%s216 + $0x30] sm:$0xf]
      %v230 = vld [vmem:[%s216 + $0x34] sm:$0xf]
      %v231 = vld [vmem:[%s216 + $0x38] sm:$0xf]
      %v232 = vld [vmem:[%s216 + $0x3c] sm:$0xf]
      %v233 = vld [vmem:[%s195] sm:$0xff]
      %v234 = vld [vmem:[%s195 + $0x8] sm:$0xff]
      %v235 = vld [vmem:[%s195 + $0x10] sm:$0xff]
      %v236 = vld [vmem:[%s195 + $0x18] sm:$0xff]
      %v237 = vld [vmem:[%s189] sm:$0xf]
      %v238 = vld [vmem:[%s189 + $0x4] sm:$0xf]
      %v239 = vld [vmem:[%s189 + $0x8] sm:$0xf]
      %v240 = vld [vmem:[%s189 + $0xc] sm:$0xf]
      %v245 = vunpack.c.l.b16 %v237
      %v246 = vunpack.c.l.b16 %v238
      %v247 = vunpack.c.l.b16 %v239
      %v248 = vunpack.c.l.b16 %v240
      %v249 = vpack.c.b16 %v246, %v245
      %v250 = vpack.c.b16 %v248, %v247
      %v269 = vunpack.c.l.b16 %v217
      %v270 = vunpack.c.l.b16 %v218
      %v271 = vunpack.c.l.b16 %v219
      %v272 = vunpack.c.l.b16 %v220
      %v273 = vunpack.c.l.b16 %v221
      %v274 = vunpack.c.l.b16 %v222
      %v275 = vunpack.c.l.b16 %v223
      %v276 = vunpack.c.l.b16 %v224
      %v277 = vunpack.c.l.b16 %v225
      %v278 = vunpack.c.l.b16 %v226
      %v279 = vunpack.c.l.b16 %v227
      %v280 = vunpack.c.l.b16 %v228
      %v281 = vunpack.c.l.b16 %v229
      %v282 = vunpack.c.l.b16 %v230
      %v283 = vunpack.c.l.b16 %v231
      %v284 = vunpack.c.l.b16 %v232
      %v285 = vpack.c.b16 %v270, %v269
      %v286 = vpack.c.b16 %v272, %v271
      %v287 = vpack.c.b16 %v274, %v273
      %v288 = vpack.c.b16 %v276, %v275
      %v289 = vpack.c.b16 %v278, %v277
      %v290 = vpack.c.b16 %v280, %v279
      %v291 = vpack.c.b16 %v282, %v281
      %v292 = vpack.c.b16 %v284, %v283
      %301 = vmatprep.subr.bf16.mxu0 0
      %302 = vmatpush1.bf16.msra.mxu0 %v292
      %303 = vmatprep.subr.bf16.mxu0 0
      %304 = vmatpush1.bf16.msra.mxu0 %v291
      %305 = vmatprep.subr.bf16.mxu0 0
      %306 = vmatpush1.bf16.msra.mxu0 %v290
      %307 = vmatprep.subr.bf16.mxu0 0
      %308 = vmatpush1.bf16.msra.mxu0 %v289
      %309 = vmatprep.subr.bf16.mxu0 0
      %310 = vmatpush1.bf16.msra.mxu0 %v288
      %311 = vmatprep.subr.bf16.mxu0 0
      %312 = vmatpush1.bf16.msra.mxu0 %v287
      %313 = vmatprep.subr.bf16.mxu0 0
      %314 = vmatpush1.bf16.msra.mxu0 %v286
      %315 = vmatprep.subr.bf16.mxu0 0
      %316 = vmatpush1.bf16.msra.mxu0 %v285
      %317 = vmatprep.subr.bf16.mxu0 0
      %318 = vmatpush2.bf16.msra.mxu0 0
      %319 = vmatprep.subr.bf16.mxu0 0
      %320 = vmatpush2.bf16.msra.mxu0 0
      %321 = vmatprep.subr.bf16.mxu0 0
      %322 = vmatpush2.bf16.msra.mxu0 0
      %323 = vmatprep.subr.bf16.mxu0 0
      %324 = vmatpush2.bf16.msra.mxu0 0
      %325 = vmatprep.subr.bf16.mxu0 0
      %326 = vmatpush2.bf16.msra.mxu0 0
      %327 = vmatprep.subr.bf16.mxu0 0
      %328 = vmatpush2.bf16.msra.mxu0 0
      %329 = vmatprep.subr.bf16.mxu0 0
      %330 = vmatpush2.bf16.msra.mxu0 0
      %331 = vmatprep.subr.bf16.mxu0 0
      %332 = vmatpush2.bf16.msra.mxu0 0
      %333 = vmatprep.mubr.bf16.mxu0 0
      %334 = vmatmul.mubr.bf16.gmra.mxu0 %v249
      %v335 = vpop.f32.mrf.mxu0
      %v336 = vadd.f32 0.0, %v335
      %v337 = vpop.f32.mrf.mxu0
      %v338 = vpop.f32.mrf.mxu0
      %v339 = vadd.f32 0.0, %v338
      %v340 = vpop.f32.mrf.mxu0
      %341 = vmatprep.mubr.bf16.mxu0 0
      %342 = vmatmul.mubr.bf16.gmra.mxu0 %v250
      %v343 = vpop.f32.mrf.mxu0
      %v344 = vadd.f32 0.0, %v343
      %v345 = vpop.f32.mrf.mxu0
      %v346 = vpop.f32.mrf.mxu0
      %v347 = vadd.f32 0.0, %v346
      %v348 = vpop.f32.mrf.mxu0
      %349 = vdwg.mxu0
      %v350 = vadd.f32 %v233, %v336
      %v351 = vadd.f32 %v234, %v339
      %v352 = vadd.f32 %v235, %v344
      %v353 = vadd.f32 %v236, %v347
      %354 = vst [vmem:[%s195] sm:$0xff] %v350
      %355 = vst [vmem:[%s195 + $0x8] sm:$0xff] %v351
      %356 = vst [vmem:[%s195 + $0x10] sm:$0xff] %v352
      %357 = vst [vmem:[%s195 + $0x18] sm:$0xff] %v353
      %s358 = smul.u32 4, %s18
      %p359 = scmp.lt.s32.totalorder %s358, 7
      %s360 = scalar_select %p359, %s358, 7
      %s361 = smul.addr %s360, 8
      %s362 = scalar_lea.vmem %s3, %s361
      // Predicated region
      $region37: #{lrgccf_forward.2} parent=31 // pred_check
        %p363 = pneg %p114
      $region38: #{lrgccf_forward.2} parent=31 // pred_check_branch
        %365 = sbr.rel (%p363) target = $region40
      $region39: #{lrgccf_forward.2} parent=31 // pred_region
        %s366 = smul.u32 4, %s18
      $region40: #{lrgccf_forward.2} parent=31 // pred_fallthru
        _
    $region32: #{lrgccf_forward.2} parent=5 // pred_fallthru
      _
    %p367 = scmp.le.s32.totalorder 2, %s9
    // Predicated region
    $region41: #{lrgccf_forward.2} parent=5 // pred_check
      %p368 = pneg %p367
    $region42: #{lrgccf_forward.2} parent=5 // pred_check_branch
      %370 = sbr.rel (%p368) target = $region44
    $region43: #{lrgccf_forward.2} parent=5 // pred_region
      %s371 = ssub.s32 %s9, 2
      // Predicated region
      $region45: #{lrgccf_forward.2} parent=43 // pred_check
        %p372 = pneg %p120
      $region46: #{lrgccf_forward.2} parent=43 // pred_check_branch
        %374 = sbr.rel (%p372) target = $region48
      $region47: #{lrgccf_forward.2} parent=43 // pred_region
        %s375 = smul.u32 4, %s20
        %p376 = scmp.lt.s32.totalorder %s375, 7
        %s377 = scalar_select %p376, %s375, 7
        %s378 = smul.addr %s377, 8
        %s379 = scalar_lea.vmem %s3, %s378
      $region48: #{lrgccf_forward.2} parent=43 // pred_fallthru
        _
    $region44: #{lrgccf_forward.2} parent=5 // pred_fallthru
      _
  $region6: #{lrgccf_forward.2} parent=0 // loop_footer
    %s13 = sadd.s32 1, %s9
  $region7: #{lrgccf_forward.2} parent=0 // loop_footer_branch
    %8 = sbr.rel target = $region3
  $region8: #{lrgccf_forward.2} parent=0 // loop_exit
    _

</llo_original>
